<compile_context>
chip_gen: v7x
topology: tpu7x:2x2x1
jax: 0.10.0
libtpu: 0.0.40
codegen_flags: <defaults>
</compile_context>

<pallas_src>
import jax
import jax.numpy as jnp
from jax.experimental import pallas as pl
from jax.experimental.pallas import tpu as pltpu


LEAKY_SLOPE = 0.01
GROUPS = 32
EPS = 1e-5
TM_MAX = 8192                       # max flattened output rows per grid step
VMEM_LIMIT = 48 * 1024 * 1024       # fits v7x's 64 MiB/TC with headroom


def _round_up(x, m):
    return ((x + m - 1) // m) * m


# ----------------------------------------------------------------------------
# Pallas kernels
# ----------------------------------------------------------------------------

def _make_convt_kernel(KH, KW, Wp, TM, MB):
    """Transposed-conv hot path on the flattened (H*Wp) plane.

    Grid = (N, Dout, MB, KD).  The input block is a full padded depth-plane
    (flattened spatial, Cin); each static (kh, kw) tap is one big matmul of a
    shifted window against the (Cin, Cout) tap weights.  kd is the only
    reduction axis, so the output block stays resident in VMEM across it.
    """
    maxoff = (KH - 1) * Wp + (KW - 1)
    LW = TM + maxoff

    def kernel(x_ref, w_ref, b_ref, o_ref):
        kd = pl.program_id(3)

        if MB == 1:
            x_loc = x_ref[0, 0]                              # (LW, Cin) bf16
        else:
            base = pl.multiple_of(pl.program_id(2) * TM, 8)  # TM % 8 == 0
            x_loc = x_ref[0, 0, pl.ds(base, LW), :]          # (LW, Cin) bf16

        acc = None
        for kh in range(KH):                                 # static taps
            for kw in range(KW):
                off = kh * Wp + kw
                contrib = jnp.dot(x_loc[off:off + TM, :], w_ref[0, kh, kw],
                                  preferred_element_type=jnp.float32)
                acc = contrib if acc is None else acc + contrib

        @pl.when(kd == 0)
        def _init():
            o_ref[0, 0] = jnp.broadcast_to(b_ref[...], o_ref.shape[2:])

        o_ref[0, 0] += acc

    return kernel


def _gn_act_kernel(y_ref, a_ref, b_ref, o_ref):
    """Fused GroupNorm scale/shift + LeakyReLU on a lane-dense (H, W*C) slab."""
    z = y_ref[0, 0] * a_ref[0, 0] + b_ref[0, 0]
    o_ref[0, 0] = jnp.where(z >= 0, z, LEAKY_SLOPE * z)


# ----------------------------------------------------------------------------
# Wrappers (glue: dilation/padding, flattening, GN statistics)
# ----------------------------------------------------------------------------

def convert_conv_weight(w_pt, b):
    """PyTorch (Cin, Cout, KD, KH, KW) -> flipped (KD, KH, KW, Cin, Cout) bf16."""
    wk = jnp.transpose(jnp.flip(w_pt, (2, 3, 4)), (2, 3, 4, 0, 1))
    return wk.astype(jnp.bfloat16), b.reshape(1, -1).astype(jnp.float32)


def conv_transpose3d(x, wk, bk, stride, ksize):
    """ConvTranspose3d (padding=0, output_padding=0) + bias, NDHWC activations."""
    N, D, H, W, Cin = x.shape
    KD, KH, KW = ksize
    Cout = wk.shape[-1]
    sd, sh, sw = stride
    Dout = (D - 1) * sd + KD
    Hout = (H - 1) * sh + KH
    Wout = (W - 1) * sw + KW
    Dp, Hp, Wp = Dout + KD - 1, Hout + KH - 1, Wout + KW - 1

    # TODO(synk): stride>1 stages still materialize the zero-dilated input; a
    # phase-decomposed transposed conv would skip the injected zeros entirely.
    if stride != (1, 1, 1):
        xd = jnp.zeros((N, (D - 1) * sd + 1, (H - 1) * sh + 1,
                        (W - 1) * sw + 1, Cin), x.dtype)
        xd = xd.at[:, ::sd, ::sh, ::sw, :].set(x)
    else:
        xd = x
    xp = jnp.pad(xd, ((0, 0), (KD - 1, KD - 1), (KH - 1, KH - 1),
                      (KW - 1, KW - 1), (0, 0)))

    # Flatten (Hp, Wp): output flat row t = h*Wp + w reads input flat rows
    # t + kh*Wp + kw, so every tap is a contiguous shifted window.  The junk
    # columns w in [Wout, Wp) are computed and sliced off afterwards.
    Mout = Hout * Wp
    maxoff = (KH - 1) * Wp + (KW - 1)
    if Mout <= TM_MAX:
        MB, TM = 1, Mout
    else:
        MB = -(-Mout // TM_MAX)
        TM = _round_up(-(-Mout // MB), 8)
    Sp = MB * TM + maxoff
    xf = xp.reshape(N, Dp, Hp * Wp, Cin)
    xf = jnp.pad(xf, ((0, 0), (0, 0), (0, Sp - Hp * Wp), (0, 0)))
    xf = xf.astype(jnp.bfloat16)          # halve DMA bytes; f32 accumulation

    kernel = _make_convt_kernel(KH, KW, Wp, TM, MB)
    out_flat = pl.pallas_call(
        kernel,
        out_shape=jax.ShapeDtypeStruct((N, Dout, MB * TM, Cout), jnp.float32),
        grid_spec=pltpu.PrefetchScalarGridSpec(
            num_scalar_prefetch=0,
            grid=(N, Dout, MB, KD),
            in_specs=[
                pl.BlockSpec((1, 1, Sp, Cin),
                             lambda n, do, m, kd: (n, do + kd, 0, 0)),
                pl.BlockSpec((1, KH, KW, Cin, Cout),
                             lambda n, do, m, kd: (kd, 0, 0, 0, 0)),
                pl.BlockSpec((1, Cout), lambda n, do, m, kd: (0, 0)),
            ],
            out_specs=pl.BlockSpec((1, 1, TM, Cout),
                                   lambda n, do, m, kd: (n, do, m, 0)),
        ),
        compiler_params=pltpu.CompilerParams(
            dimension_semantics=("parallel", "parallel", "parallel",
                                 "arbitrary"),
            vmem_limit_bytes=VMEM_LIMIT),
    )(xf, wk, bk)

    out = out_flat[:, :, :Mout, :].reshape(N, Dout, Hout, Wp, Cout)
    return out[:, :, :, :Wout, :]


def conv_transpose3d_ref(x, wk, bk, stride, ksize):
    """Pure-XLA reference (same bf16-rounded inputs as the Pallas kernel)."""
    KD, KH, KW = ksize
    xb = x.astype(jnp.bfloat16).astype(jnp.float32)
    wb = wk.astype(jnp.float32)
    out = jax.lax.conv_general_dilated(
        xb, wb, window_strides=(1, 1, 1),
        padding=[(KD - 1, KD - 1), (KH - 1, KH - 1), (KW - 1, KW - 1)],
        lhs_dilation=stride,
        dimension_numbers=("NDHWC", "DHWIO", "NDHWC"),
        precision=jax.lax.Precision.HIGHEST)
    return out + bk.reshape(1, 1, 1, 1, -1)


def group_norm_leaky_relu(y, gamma, beta, groups=GROUPS, eps=EPS):
    """GroupNorm(groups, C) + LeakyReLU(0.01) over an NDHWC tensor."""
    N, D, H, W, C = y.shape
    cg = C // groups
    # TODO(synk): per-(sample, group) mean/var stay in XLA (f32); fusing the
    # sums into the conv epilogue would save one full HBM read per TCNA block.
    yg = y.reshape(N, D, H, W, groups, cg)
    mean = jnp.mean(yg, axis=(1, 2, 3, 5))                     # (N, G) biased
    var = jnp.var(yg, axis=(1, 2, 3, 5))
    rstd = jax.lax.rsqrt(var + eps)
    scale = jnp.repeat(rstd, cg, axis=1) * gamma[None, :]      # (N, C)
    shift = beta[None, :] - jnp.repeat(mean, cg, axis=1) * scale
    # Tile per-channel scale/shift across W so the kernel lane dim is W*C
    # (lane-dense stores) and the grid is only (N, D).
    a = jnp.tile(scale, (1, W)).reshape(N, 1, 1, W * C).astype(jnp.float32)
    b = jnp.tile(shift, (1, W)).reshape(N, 1, 1, W * C).astype(jnp.float32)
    yf = y.reshape(N, D, H, W * C)

    out = pl.pallas_call(
        _gn_act_kernel,
        out_shape=jax.ShapeDtypeStruct((N, D, H, W * C), jnp.float32),
        grid_spec=pltpu.PrefetchScalarGridSpec(
            num_scalar_prefetch=0,
            grid=(N, D),
            in_specs=[
                pl.BlockSpec((1, 1, H, W * C), lambda n, d: (n, d, 0, 0)),
                pl.BlockSpec((1, 1, 1, W * C), lambda n, d: (n, 0, 0, 0)),
                pl.BlockSpec((1, 1, 1, W * C), lambda n, d: (n, 0, 0, 0)),
            ],
            out_specs=pl.BlockSpec((1, 1, H, W * C), lambda n, d: (n, d, 0, 0)),
        ),
        compiler_params=pltpu.CompilerParams(
            dimension_semantics=("parallel", "parallel"),
            vmem_limit_bytes=VMEM_LIMIT),
    )(yf, a, b)
    return out.reshape(N, D, H, W, C)


def group_norm_leaky_relu_ref(y, gamma, beta, groups=GROUPS, eps=EPS):
    N, D, H, W, C = y.shape
    cg = C // groups
    yg = y.reshape(N, D, H, W, groups, cg)
    mean = jnp.mean(yg, axis=(1, 2, 3, 5), keepdims=True)
    var = jnp.var(yg, axis=(1, 2, 3, 5), keepdims=True)
    z = ((yg - mean) * jax.lax.rsqrt(var + eps)).reshape(N, D, H, W, C)
    z = z * gamma + beta
    return jnp.where(z >= 0, z, LEAKY_SLOPE * z)


# ----------------------------------------------------------------------------
# Decoder definition (real channel constants from the reference module)
# ----------------------------------------------------------------------------

C = [320, 256, 128, 64, 32]

LAYERS = [
    [("tcna", C[0], C[0], (1, 1, 1), (3, 3, 3)),
     ("tcna", C[0], C[0], (1, 1, 1), (3, 3, 3)),
     ("up",   C[0], C[1], (1, 1, 1), (1, 3, 3))],
    [("tcna", C[1], C[1], (1, 2, 2), (3, 3, 3)),
     # TODO(synk): reference declares TCNA(320, 320) here (channel mismatch);
     # use 256 -> 256 so the sequential graph is runnable.
     ("tcna", C[1], C[1], (1, 1, 1), (3, 3, 3)),
     ("up",   C[1], C[2], (1, 1, 1), (3, 3, 3))],
    [("tcna", C[2], C[2], (2, 2, 2), (3, 3, 3)),
     ("tcna", C[2], C[2], (1, 1, 1), (3, 3, 3)),
     ("up",   C[2], C[3], (1, 1, 1), (3, 3, 3))],
    [("tcna", C[3], C[3], (2, 2, 2), (3, 3, 3)),
     ("tcna", C[3], C[3], (1, 1, 1), (3, 3, 3)),
     ("up",   C[3], C[4], (1, 1, 1), (3, 3, 3))],
    [("tcna", C[4], C[4], (1, 2, 2), (1, 3, 3)),
     ("tcna", C[4], C[4], (1, 1, 1), (1, 3, 3)),
     ("up",   C[4], C[4], (1, 1, 1), (1, 3, 3))],
]


def init_params(key):
    params = []
    for layer in LAYERS:
        lp = []
        for (kind, cin, cout, stride, ks) in layer:
            key, kw_, kb_, kg_, kbt_ = jax.random.split(key, 5)
            fan = cin * ks[0] * ks[1] * ks[2]
            bound = 1.0 / (fan ** 0.5)
            # PyTorch ConvTranspose3d weight layout: (Cin, Cout, KD, KH, KW)
            w_pt = jax.random.uniform(kw_, (cin, cout) + tuple(ks),
                                      jnp.float32, -bound, bound)
            b = jax.random.uniform(kb_, (cout,), jnp.float32, -bound, bound)
            wk, bk = convert_conv_weight(w_pt, b)   # pre-flipped, once
            p = {"kind": kind, "stride": stride, "ksize": ks, "wk": wk, "bk": bk}
            if kind == "tcna":
                p["gamma"] = 1.0 + 0.1 * jax.random.normal(kg_, (cout,),
                                                           jnp.float32)
                p["beta"] = 0.1 * jax.random.normal(kbt_, (cout,), jnp.float32)
            lp.append(p)
        params.append(lp)
    return params


def decoder_forward(x, params):
    for layer in params:
        for p in layer:
            x = conv_transpose3d(x, p["wk"], p["bk"], p["stride"], p["ksize"])
            if p["kind"] == "tcna":
                x = group_norm_leaky_relu(x, p["gamma"], p["beta"])
    return x


# ----------------------------------------------------------------------------
# Main
# ----------------------------------------------------------------------------

def _check_conv(key, cin, cout, stride, ksize, spatial):
    k1, k2, k3 = jax.random.split(key, 3)
    x = jax.random.normal(k1, (1,) + spatial + (cin,), jnp.float32)
    w_pt = 0.2 * jax.random.normal(k2, (cin, cout) + ksize, jnp.float32)
    b = 0.2 * jax.random.normal(k3, (cout,), jnp.float32)
    wk, bk = convert_conv_weight(w_pt, b)
    y = conv_transpose3d(x, wk, bk, stride, ksize)
    y_ref = conv_transpose3d_ref(x, wk, bk, stride, ksize)
    err = float(jnp.max(jnp.abs(y - y_ref)))
    ref = float(jnp.max(jnp.abs(y_ref))) + 1e-6
    assert err <= 1e-3 * ref + 1e-4, f"conv mismatch: err={err} ref={ref}"


if __name__ == "__main__":
    key = jax.random.PRNGKey(0)
    pkey, xkey, ckey = jax.random.split(key, 3)
    params = init_params(pkey)

    # Quick correctness checks of the Pallas transposed conv vs XLA (tiny shapes,
    # covering stride-1, stride-(1,2,2), stride-(2,2,2) and the (1,3,3) kernel).
    for cfg in [(8, 16, (1, 1, 1), (3, 3, 3), (2, 3, 3)),
                (8, 16, (1, 2, 2), (3, 3, 3), (2, 3, 3)),
                (16, 8, (2, 2, 2), (3, 3, 3), (2, 3, 3)),
                (16, 8, (1, 2, 2), (1, 3, 3), (2, 3, 3))]:
        ckey, sub = jax.random.split(ckey)
        _check_conv(sub, *cfg)

    # GroupNorm + LeakyReLU check.
    ckey, kgn, kg2, kb2 = jax.random.split(ckey, 4)
    yt = jax.random.normal(kgn, (1, 2, 3, 4, 64), jnp.float32)
    gt = 1.0 + 0.1 * jax.random.normal(kg2, (64,), jnp.float32)
    bt = 0.1 * jax.random.normal(kb2, (64,), jnp.float32)
    gn_err = float(jnp.max(jnp.abs(group_norm_leaky_relu(yt, gt, bt)
                                   - group_norm_leaky_relu_ref(yt, gt, bt))))
    assert gn_err < 1e-3, f"groupnorm mismatch: {gn_err}"

    # Small example input: NDHWC (1, 1, 1, 1, 320) == NCDHW (1, 320, 1, 1, 1).
    x = jax.random.normal(xkey, (1, 1, 1, 1, C[0]), jnp.float32)

    # Check the first real decoder conv (320 -> 320, tiny spatial).
    p0 = params[0][0]
    y_pl = conv_transpose3d(x, p0["wk"], p0["bk"], p0["stride"], p0["ksize"])
    y_xla = conv_transpose3d_ref(x, p0["wk"], p0["bk"], p0["stride"], p0["ksize"])
    err = float(jnp.max(jnp.abs(y_pl - y_xla)))
    ref = float(jnp.max(jnp.abs(y_xla))) + 1e-6
    assert err <= 1e-3 * ref + 1e-4, f"decoder conv0 mismatch: {err} / {ref}"

    out = decoder_forward(x, params)
    out = jax.block_until_ready(out)   # NDHWC (1, 59, 187, 187, 32)
    print("KERNEL_OK")
</pallas_src>

<mosaic_0001>
module attributes {stable_mosaic.version = 11 : i64} {
  func.func @kernel(%arg0: i32, %arg1: i32, %arg2: i32, %arg3: i32, %arg4: memref<1x1x51x8xbf16, #tpu.memory_space<vmem>>, %arg5: memref<1x3x3x8x16xbf16, #tpu.memory_space<vmem>>, %arg6: memref<1x16xf32, #tpu.memory_space<vmem>>, %arg7: memref<1x1x35x16xf32, #tpu.memory_space<vmem>>) attributes {dimension_semantics = [#tpu.dimension_semantics<parallel>, #tpu.dimension_semantics<parallel>, #tpu.dimension_semantics<parallel>, #tpu.dimension_semantics<arbitrary>], iteration_bounds = array<i64: 1, 4, 1, 3>, scalar_prefetch = 0 : i64, scratch_operands = 0 : i64, tpu.core_type = #tpu.core_type<tc>, window_params = [{transform_indices = @transform_0, window_bounds = array<i64: 1, 1, 51, 8>}, {transform_indices = @transform_1, window_bounds = array<i64: 1, 3, 3, 8, 16>}, {pipeline_mode = #tpu.pipeline_mode<synchronous>, transform_indices = @transform_2, window_bounds = array<i64: 1, 16>}, {transform_indices = @transform_3, window_bounds = array<i64: 1, 1, 35, 16>}]} {
    %c0 = arith.constant 0 : index
    %c0_0 = arith.constant 0 : index
    %c0_1 = arith.constant 0 : index
    %c0_2 = arith.constant 0 : index
    %0 = vector.load %arg4[%c0, %c0_0, %c0_1, %c0_2] : memref<1x1x51x8xbf16, #tpu.memory_space<vmem>>, vector<1x1x51x8xbf16>
    %1 = vector.shape_cast %0 : vector<1x1x51x8xbf16> to vector<51x8xbf16>
    %2 = vector.extract_strided_slice %1 {offsets = [0, 0], sizes = [35, 8], strides = [1, 1]} : vector<51x8xbf16> to vector<35x8xbf16>
    %c0_3 = arith.constant 0 : index
    %c0_4 = arith.constant 0 : index
    %c0_5 = arith.constant 0 : index
    %c0_6 = arith.constant 0 : index
    %c0_7 = arith.constant 0 : index
    %3 = vector.load %arg5[%c0_3, %c0_4, %c0_5, %c0_6, %c0_7] : memref<1x3x3x8x16xbf16, #tpu.memory_space<vmem>>, vector<1x1x1x8x16xbf16>
    %4 = vector.shape_cast %3 : vector<1x1x1x8x16xbf16> to vector<8x16xbf16>
    %cst = arith.constant dense<0.000000e+00> : vector<35x16xf32>
    %5 = tpu.matmul %2, %4, %cst {dimension_numbers = #tpu.dot_dimension_numbers<[1], [0], [0], [1], [0, 0, 1, 1], [], []>} : vector<35x8xbf16>, vector<8x16xbf16>, vector<35x16xf32> -> vector<35x16xf32>
    %6 = vector.extract_strided_slice %1 {offsets = [1, 0], sizes = [35, 8], strides = [1, 1]} : vector<51x8xbf16> to vector<35x8xbf16>
    %c0_8 = arith.constant 0 : index
    %c0_9 = arith.constant 0 : index
    %c1 = arith.constant 1 : index
    %c0_10 = arith.constant 0 : index
    %c0_11 = arith.constant 0 : index
    %7 = vector.load %arg5[%c0_8, %c0_9, %c1, %c0_10, %c0_11] : memref<1x3x3x8x16xbf16, #tpu.memory_space<vmem>>, vector<1x1x1x8x16xbf16>
    %8 = vector.shape_cast %7 : vector<1x1x1x8x16xbf16> to vector<8x16xbf16>
    %cst_12 = arith.constant dense<0.000000e+00> : vector<35x16xf32>
    %9 = tpu.matmul %6, %8, %cst_12 {dimension_numbers = #tpu.dot_dimension_numbers<[1], [0], [0], [1], [0, 0, 1, 1], [], []>} : vector<35x8xbf16>, vector<8x16xbf16>, vector<35x16xf32> -> vector<35x16xf32>
    %10 = arith.addf %5, %9 : vector<35x16xf32>
    %11 = vector.extract_strided_slice %1 {offsets = [2, 0], sizes = [35, 8], strides = [1, 1]} : vector<51x8xbf16> to vector<35x8xbf16>
    %c0_13 = arith.constant 0 : index
    %c0_14 = arith.constant 0 : index
    %c2 = arith.constant 2 : index
    %c0_15 = arith.constant 0 : index
    %c0_16 = arith.constant 0 : index
    %12 = vector.load %arg5[%c0_13, %c0_14, %c2, %c0_15, %c0_16] : memref<1x3x3x8x16xbf16, #tpu.memory_space<vmem>>, vector<1x1x1x8x16xbf16>
    %13 = vector.shape_cast %12 : vector<1x1x1x8x16xbf16> to vector<8x16xbf16>
    %cst_17 = arith.constant dense<0.000000e+00> : vector<35x16xf32>
    %14 = tpu.matmul %11, %13, %cst_17 {dimension_numbers = #tpu.dot_dimension_numbers<[1], [0], [0], [1], [0, 0, 1, 1], [], []>} : vector<35x8xbf16>, vector<8x16xbf16>, vector<35x16xf32> -> vector<35x16xf32>
    %15 = arith.addf %10, %14 : vector<35x16xf32>
    %16 = vector.extract_strided_slice %1 {offsets = [7, 0], sizes = [35, 8], strides = [1, 1]} : vector<51x8xbf16> to vector<35x8xbf16>
    %c0_18 = arith.constant 0 : index
    %c1_19 = arith.constant 1 : index
    %c0_20 = arith.constant 0 : index
    %c0_21 = arith.constant 0 : index
    %c0_22 = arith.constant 0 : index
    %17 = vector.load %arg5[%c0_18, %c1_19, %c0_20, %c0_21, %c0_22] : memref<1x3x3x8x16xbf16, #tpu.memory_space<vmem>>, vector<1x1x1x8x16xbf16>
    %18 = vector.shape_cast %17 : vector<1x1x1x8x16xbf16> to vector<8x16xbf16>
    %cst_23 = arith.constant dense<0.000000e+00> : vector<35x16xf32>
    %19 = tpu.matmul %16, %18, %cst_23 {dimension_numbers = #tpu.dot_dimension_numbers<[1], [0], [0], [1], [0, 0, 1, 1], [], []>} : vector<35x8xbf16>, vector<8x16xbf16>, vector<35x16xf32> -> vector<35x16xf32>
    %20 = arith.addf %15, %19 : vector<35x16xf32>
    %21 = vector.extract_strided_slice %1 {offsets = [8, 0], sizes = [35, 8], strides = [1, 1]} : vector<51x8xbf16> to vector<35x8xbf16>
    %c0_24 = arith.constant 0 : index
    %c1_25 = arith.constant 1 : index
    %c1_26 = arith.constant 1 : index
    %c0_27 = arith.constant 0 : index
    %c0_28 = arith.constant 0 : index
    %22 = vector.load %arg5[%c0_24, %c1_25, %c1_26, %c0_27, %c0_28] : memref<1x3x3x8x16xbf16, #tpu.memory_space<vmem>>, vector<1x1x1x8x16xbf16>
    %23 = vector.shape_cast %22 : vector<1x1x1x8x16xbf16> to vector<8x16xbf16>
    %cst_29 = arith.constant dense<0.000000e+00> : vector<35x16xf32>
    %24 = tpu.matmul %21, %23, %cst_29 {dimension_numbers = #tpu.dot_dimension_numbers<[1], [0], [0], [1], [0, 0, 1, 1], [], []>} : vector<35x8xbf16>, vector<8x16xbf16>, vector<35x16xf32> -> vector<35x16xf32>
    %25 = arith.addf %20, %24 : vector<35x16xf32>
    %26 = vector.extract_strided_slice %1 {offsets = [9, 0], sizes = [35, 8], strides = [1, 1]} : vector<51x8xbf16> to vector<35x8xbf16>
    %c0_30 = arith.constant 0 : index
    %c1_31 = arith.constant 1 : index
    %c2_32 = arith.constant 2 : index
    %c0_33 = arith.constant 0 : index
    %c0_34 = arith.constant 0 : index
    %27 = vector.load %arg5[%c0_30, %c1_31, %c2_32, %c0_33, %c0_34] : memref<1x3x3x8x16xbf16, #tpu.memory_space<vmem>>, vector<1x1x1x8x16xbf16>
    %28 = vector.shape_cast %27 : vector<1x1x1x8x16xbf16> to vector<8x16xbf16>
    %cst_35 = arith.constant dense<0.000000e+00> : vector<35x16xf32>
    %29 = tpu.matmul %26, %28, %cst_35 {dimension_numbers = #tpu.dot_dimension_numbers<[1], [0], [0], [1], [0, 0, 1, 1], [], []>} : vector<35x8xbf16>, vector<8x16xbf16>, vector<35x16xf32> -> vector<35x16xf32>
    %30 = arith.addf %25, %29 : vector<35x16xf32>
    %31 = vector.extract_strided_slice %1 {offsets = [14, 0], sizes = [35, 8], strides = [1, 1]} : vector<51x8xbf16> to vector<35x8xbf16>
    %c0_36 = arith.constant 0 : index
    %c2_37 = arith.constant 2 : index
    %c0_38 = arith.constant 0 : index
    %c0_39 = arith.constant 0 : index
    %c0_40 = arith.constant 0 : index
    %32 = vector.load %arg5[%c0_36, %c2_37, %c0_38, %c0_39, %c0_40] : memref<1x3x3x8x16xbf16, #tpu.memory_space<vmem>>, vector<1x1x1x8x16xbf16>
    %33 = vector.shape_cast %32 : vector<1x1x1x8x16xbf16> to vector<8x16xbf16>
    %cst_41 = arith.constant dense<0.000000e+00> : vector<35x16xf32>
    %34 = tpu.matmul %31, %33, %cst_41 {dimension_numbers = #tpu.dot_dimension_numbers<[1], [0], [0], [1], [0, 0, 1, 1], [], []>} : vector<35x8xbf16>, vector<8x16xbf16>, vector<35x16xf32> -> vector<35x16xf32>
    %35 = arith.addf %30, %34 : vector<35x16xf32>
    %36 = vector.extract_strided_slice %1 {offsets = [15, 0], sizes = [35, 8], strides = [1, 1]} : vector<51x8xbf16> to vector<35x8xbf16>
    %c0_42 = arith.constant 0 : index
    %c2_43 = arith.constant 2 : index
    %c1_44 = arith.constant 1 : index
    %c0_45 = arith.constant 0 : index
    %c0_46 = arith.constant 0 : index
    %37 = vector.load %arg5[%c0_42, %c2_43, %c1_44, %c0_45, %c0_46] : memref<1x3x3x8x16xbf16, #tpu.memory_space<vmem>>, vector<1x1x1x8x16xbf16>
    %38 = vector.shape_cast %37 : vector<1x1x1x8x16xbf16> to vector<8x16xbf16>
    %cst_47 = arith.constant dense<0.000000e+00> : vector<35x16xf32>
    %39 = tpu.matmul %36, %38, %cst_47 {dimension_numbers = #tpu.dot_dimension_numbers<[1], [0], [0], [1], [0, 0, 1, 1], [], []>} : vector<35x8xbf16>, vector<8x16xbf16>, vector<35x16xf32> -> vector<35x16xf32>
    %40 = arith.addf %35, %39 : vector<35x16xf32>
    %41 = vector.extract_strided_slice %1 {offsets = [16, 0], sizes = [35, 8], strides = [1, 1]} : vector<51x8xbf16> to vector<35x8xbf16>
    %c0_48 = arith.constant 0 : index
    %c2_49 = arith.constant 2 : index
    %c2_50 = arith.constant 2 : index
    %c0_51 = arith.constant 0 : index
    %c0_52 = arith.constant 0 : index
    %42 = vector.load %arg5[%c0_48, %c2_49, %c2_50, %c0_51, %c0_52] : memref<1x3x3x8x16xbf16, #tpu.memory_space<vmem>>, vector<1x1x1x8x16xbf16>
    %43 = vector.shape_cast %42 : vector<1x1x1x8x16xbf16> to vector<8x16xbf16>
    %cst_53 = arith.constant dense<0.000000e+00> : vector<35x16xf32>
    %44 = tpu.matmul %41, %43, %cst_53 {dimension_numbers = #tpu.dot_dimension_numbers<[1], [0], [0], [1], [0, 0, 1, 1], [], []>} : vector<35x8xbf16>, vector<8x16xbf16>, vector<35x16xf32> -> vector<35x16xf32>
    %45 = arith.addf %40, %44 : vector<35x16xf32>
    %c0_i32 = arith.constant 0 : i32
    %46 = arith.cmpi eq, %arg3, %c0_i32 : i32
    %47 = arith.extui %46 : i1 to i32
    %c0_i32_54 = arith.constant 0 : i32
    %48 = arith.cmpi ne, %47, %c0_i32_54 : i32
    scf.if %48 {
      %c0_63 = arith.constant 0 : index
      %c0_64 = arith.constant 0 : index
      %55 = vector.load %arg6[%c0_63, %c0_64] : memref<1x16xf32, #tpu.memory_space<vmem>>, vector<1x16xf32>
      %56 = vector.shape_cast %55 : vector<1x16xf32> to vector<1x16xf32>
      %57 = vector.broadcast %56 : vector<1x16xf32> to vector<35x16xf32>
      %c0_65 = arith.constant 0 : index
      %c0_66 = arith.constant 0 : index
      %c0_67 = arith.constant 0 : index
      %c0_68 = arith.constant 0 : index
      %58 = vector.load %arg7[%c0_65, %c0_66, %c0_67, %c0_68] : memref<1x1x35x16xf32, #tpu.memory_space<vmem>>, vector<1x1x35x16xf32>
      %59 = vector.shape_cast %58 : vector<1x1x35x16xf32> to vector<35x16xf32>
      %60 = vector.shape_cast %57 : vector<35x16xf32> to vector<1x1x35x16xf32>
      tpu.vector_store %arg7[%c0_65, %c0_66, %c0_67, %c0_68], %60 {strides = array<i32>} : memref<1x1x35x16xf32, #tpu.memory_space<vmem>>, vector<1x1x35x16xf32>,
    } else {
    }
    %c0_55 = arith.constant 0 : index
    %c0_56 = arith.constant 0 : index
    %c0_57 = arith.constant 0 : index
    %c0_58 = arith.constant 0 : index
    %49 = vector.load %arg7[%c0_55, %c0_56, %c0_57, %c0_58] : memref<1x1x35x16xf32, #tpu.memory_space<vmem>>, vector<1x1x35x16xf32>
    %50 = vector.shape_cast %49 : vector<1x1x35x16xf32> to vector<35x16xf32>
    %51 = arith.addf %50, %45 : vector<35x16xf32>
    %c0_59 = arith.constant 0 : index
    %c0_60 = arith.constant 0 : index
    %c0_61 = arith.constant 0 : index
    %c0_62 = arith.constant 0 : index
    %52 = vector.load %arg7[%c0_59, %c0_60, %c0_61, %c0_62] : memref<1x1x35x16xf32, #tpu.memory_space<vmem>>, vector<1x1x35x16xf32>
    %53 = vector.shape_cast %52 : vector<1x1x35x16xf32> to vector<35x16xf32>
    %54 = vector.shape_cast %51 : vector<35x16xf32> to vector<1x1x35x16xf32>
    tpu.vector_store %arg7[%c0_59, %c0_60, %c0_61, %c0_62], %54 {strides = array<i32>} : memref<1x1x35x16xf32, #tpu.memory_space<vmem>>, vector<1x1x35x16xf32>,
    return
  }
  func.func @transform_0(%arg0: i32, %arg1: i32, %arg2: i32, %arg3: i32) -> (i32, i32, i32, i32) {
    %0 = arith.addi %arg1, %arg3 : i32
    %c0_i32 = arith.constant 0 : i32
    %c0_i32_0 = arith.constant 0 : i32
    %c0_i32_1 = arith.constant 0 : i32
    return %arg0, %0, %c0_i32, %c0_i32_0 : i32, i32, i32, i32
  }
  func.func @transform_1(%arg0: i32, %arg1: i32, %arg2: i32, %arg3: i32) -> (i32, i32, i32, i32, i32) {
    %c0_i32 = arith.constant 0 : i32
    %c0_i32_0 = arith.constant 0 : i32
    %c0_i32_1 = arith.constant 0 : i32
    %c0_i32_2 = arith.constant 0 : i32
    %c0_i32_3 = arith.constant 0 : i32
    return %arg3, %c0_i32, %c0_i32_0, %c0_i32_1, %c0_i32_2 : i32, i32, i32, i32, i32
  }
  func.func @transform_2(%arg0: i32, %arg1: i32, %arg2: i32, %arg3: i32) -> (i32, i32) {
    %c0_i32 = arith.constant 0 : i32
    %c0_i32_0 = arith.constant 0 : i32
    %c0_i32_1 = arith.constant 0 : i32
    return %c0_i32, %c0_i32_0 : i32, i32
  }
  func.func @transform_3(%arg0: i32, %arg1: i32, %arg2: i32, %arg3: i32) -> (i32, i32, i32, i32) {
    %c0_i32 = arith.constant 0 : i32
    %c0_i32_0 = arith.constant 0 : i32
    return %arg0, %arg1, %arg2, %c0_i32 : i32, i32, i32, i32
  }
}

</mosaic_0001>

<llo_original>
// kernel: tpu_custom_call.1
$region0: #{tpu_custom_call.1}
  #allocation0 [shape = 'u32[]', space=smem, size = 0x4, offset = 0x4, fixed_abs, tag = 'smem constant byte address 0x4 - core index']
  #allocation1 [shape = 'u32[144,128]{1,0:T(1,128)}', space=vmem, size = 0x12000, scoped, tag = 'internal scratch']
  %s0 = inlined_call_operand.vmem [shape: bf16[1,6,51,8], index: 0, kind: input, shape index: {}]
  %s1 = inlined_call_operand.vmem [shape: bf16[3,3,3,8,16], index: 1, kind: input, shape index: {}]
  %s2 = inlined_call_operand.vmem [shape: f32[1,16], index: 2, kind: input, shape index: {}]
  %s3 = inlined_call_operand.vmem [shape: f32[1,4,35,16], index: 3, kind: output, shape index: {}]
  %s4 = sld [smem:[#allocation0]]
  $region49: #{tpu_custom_call.1} parent=0
    _
  %s6 = ssub.s32 1, %s4
  %s7 = scalar_select 0, %s6, %s4
  loop: start=0, step=1, limit=14
  $region2: #{tpu_custom_call.1} parent=0 // loop_pre_header
    _
  $region3: #{tpu_custom_call.1} parent=0 // loop_header
    %s9 = sphi 0, %s13
    %p10 = scmp.ge.s32.totalorder %s9, 14
    %s16 = sphi 0, %s42
    %s17 = sphi 0, %s38
    %s18 = sphi 0, %s34
    %s19 = sphi 0, %s30
    %s20 = sphi 0, %s16
    %s21 = sphi 0, %s17
    %s22 = sphi 0, %s18
    %s23 = sphi 0, %s19
    %s24 = sphi 0, %s20
    %s25 = sphi 0, %s21
    %s26 = sphi 0, %s22
    %s27 = sphi 0, %s23
    %s49 = sphi 0, %s51
    %s52 = sphi 0, %s49
    %s53 = sphi 0, %s52
    %s69 = sphi 0, %s53
    %s75 = sphi 0, %s77
    %s78 = sphi 0, %s75
    %s79 = sphi 0, %s78
    %s95 = sphi 0, %s79
    %s99 = sphi 0, %s99
    %s101 = sphi 0, %s99
    %s102 = sphi 0, %s101
    %s116 = sphi 0, %s102
    %s126 = sphi 0, %s128
    %s129 = sphi 0, %s126
    %s130 = sphi 0, %s129
    %s146 = sphi 0, %s130
  $region4: #{tpu_custom_call.1} parent=0 // loop_header_branch
    %12 = sbr.rel (%p10) target = $region8
  $region5: #{tpu_custom_call.1} parent=0 // loop_body
    %s14 = ssub.s32 %s9, 1
    %s15 = ssub.s32 %s9, 2
    %s28 = sadd.s32 1, %s19
    %p29 = scmp.ge.s32.totalorder %s28, 3
    %s30 = scalar_select %p29, 0, %s28
    %s31 = sadd.s32 1, %s18
    %s32 = scalar_select %p29, %s31, %s18
    %p33 = scmp.ge.s32.totalorder %s32, 1
    %s34 = scalar_select %p33, 0, %s32
    %s35 = sadd.s32 1, %s17
    %s36 = scalar_select %p33, %s35, %s17
    %p37 = scmp.ge.s32.totalorder %s36, 4
    %s38 = scalar_select %p37, 0, %s36
    %s39 = sadd.s32 1, %s16
    %s40 = scalar_select %p37, %s39, %s16
    %p41 = scmp.ge.s32.totalorder %s40, 1
    %s42 = scalar_select %p41, 0, %s40
    %s43 = sadd.s32 %s17, %s19
    %s44 = sadd.s32 %s38, %s30
    %s45 = ssub.s32 %s16, %s42
    %s46 = ssub.s32 %s43, %s44
    %s47 = sor.u32 %s45, %s46
    %p48 = scmp.eq.s32.totalorder %s47, 0
    %s50 = sadd.s32 %s49, 1
    %s51 = scalar_select %p48, %s49, %s50
    %p54 = pneg %p48
    %p55 = scmp.eq.s32.totalorder %s9, 11
    %p56 = por %p54, %p55
    %p57 = scmp.ne.s32.totalorder %s49, %s52
    %p58 = scmp.eq.s32.totalorder %s9, 0
    %p59 = por %p57, %p58
    %p60 = scmp.ne.s32.totalorder %s49, %s52
    %p61 = scmp.eq.s32.totalorder %s14, 11
    %p62 = por %p60, %p61
    %p63 = scmp.ne.s32.totalorder %s52, %s53
    %p64 = scmp.eq.s32.totalorder %s14, 0
    %p65 = por %p63, %p64
    %p66 = scmp.ne.s32.totalorder %s52, %s53
    %p67 = scmp.eq.s32.totalorder %s15, 11
    %p68 = por %p66, %p67
    %p70 = scmp.ne.s32.totalorder %s53, %s69
    %p71 = scmp.eq.s32.totalorder %s15, 0
    %p72 = por %p70, %p71
    %s73 = ssub.s32 %s19, %s30
    %p74 = scmp.eq.s32.totalorder %s73, 0
    %s76 = sadd.s32 %s75, 1
    %s77 = scalar_select %p74, %s75, %s76
    %p80 = pneg %p74
    %p81 = scmp.eq.s32.totalorder %s9, 11
    %p82 = por %p80, %p81
    %p83 = scmp.ne.s32.totalorder %s75, %s78
    %p84 = scmp.eq.s32.totalorder %s9, 0
    %p85 = por %p83, %p84
    %p86 = scmp.ne.s32.totalorder %s75, %s78
    %p87 = scmp.eq.s32.totalorder %s14, 11
    %p88 = por %p86, %p87
    %p89 = scmp.ne.s32.totalorder %s78, %s79
    %p90 = scmp.eq.s32.totalorder %s14, 0
    %p91 = por %p89, %p90
    %p92 = scmp.ne.s32.totalorder %s78, %s79
    %p93 = scmp.eq.s32.totalorder %s15, 11
    %p94 = por %p92, %p93
    %p96 = scmp.ne.s32.totalorder %s79, %s95
    %p97 = scmp.eq.s32.totalorder %s15, 0
    %p98 = por %p96, %p97
    %s100 = sadd.s32 %s99, 1
    %p103 = scmp.eq.s32.totalorder %s9, 11
    %p104 = scmp.ne.s32.totalorder %s99, %s101
    %p105 = scmp.eq.s32.totalorder %s9, 0
    %p106 = por %p104, %p105
    %p107 = scmp.ne.s32.totalorder %s99, %s101
    %p108 = scmp.eq.s32.totalorder %s14, 11
    %p109 = por %p107, %p108
    %p110 = scmp.ne.s32.totalorder %s101, %s102
    %p111 = scmp.eq.s32.totalorder %s14, 0
    %p112 = por %p110, %p111
    %p113 = scmp.ne.s32.totalorder %s101, %s102
    %p114 = scmp.eq.s32.totalorder %s15, 11
    %p115 = por %p113, %p114
    %p117 = scmp.ne.s32.totalorder %s102, %s116
    %p118 = scmp.eq.s32.totalorder %s15, 0
    %p119 = por %p117, %p118
    %s120 = ssub.s32 %s16, %s42
    %s121 = ssub.s32 %s17, %s38
    %s122 = sor.u32 %s120, %s121
    %s123 = ssub.s32 %s18, %s34
    %s124 = sor.u32 %s122, %s123
    %p125 = scmp.eq.s32.totalorder %s124, 0
    %s127 = sadd.s32 %s126, 1
    %s128 = scalar_select %p125, %s126, %s127
    %p131 = pneg %p125
    %p132 = scmp.eq.s32.totalorder %s9, 11
    %p133 = por %p131, %p132
    %p134 = scmp.ne.s32.totalorder %s126, %s129
    %p135 = scmp.eq.s32.totalorder %s9, 0
    %p136 = por %p134, %p135
    %p137 = scmp.ne.s32.totalorder %s126, %s129
    %p138 = scmp.eq.s32.totalorder %s14, 11
    %p139 = por %p137, %p138
    %p140 = scmp.ne.s32.totalorder %s129, %s130
    %p141 = scmp.eq.s32.totalorder %s14, 0
    %p142 = por %p140, %p141
    %p143 = scmp.ne.s32.totalorder %s129, %s130
    %p144 = scmp.eq.s32.totalorder %s15, 11
    %p145 = por %p143, %p144
    %p147 = scmp.ne.s32.totalorder %s130, %s146
    %p148 = scmp.eq.s32.totalorder %s15, 0
    %p149 = por %p147, %p148
    %p150 = scmp.le.s32.totalorder 1, %s9
    %p151 = scmp.lt.s32.totalorder %s9, 13
    %p152 = pnand %p150, %p151
    %p153 = pneg %p152
    // Predicated region
    $region9: #{tpu_custom_call.1} parent=5 // pred_check
      _
    $region10: #{tpu_custom_call.1} parent=5 // pred_check_branch
      %155 = sbr.rel (%p152) target = $region12
    $region11: #{tpu_custom_call.1} parent=5 // pred_region
      %s156 = ssub.s32 %s9, 1
      // Predicated region
      $region13: #{tpu_custom_call.1} parent=11 // pred_check
        %p157 = pneg %p112
      $region14: #{tpu_custom_call.1} parent=11 // pred_check_branch
        %159 = sbr.rel (%p157) target = $region16
      $region15: #{tpu_custom_call.1} parent=11 // pred_region
        _
      $region16: #{tpu_custom_call.1} parent=11 // pred_fallthru
        _
    $region12: #{tpu_custom_call.1} parent=5 // pred_fallthru
      _
    %p160 = scmp.lt.s32.totalorder %s9, 12
    // Predicated region
    $region17: #{tpu_custom_call.1} parent=5 // pred_check
      %p161 = pneg %p160
    $region18: #{tpu_custom_call.1} parent=5 // pred_check_branch
      %163 = sbr.rel (%p161) target = $region20
    $region19: #{tpu_custom_call.1} parent=5 // pred_region
      // Predicated region
      $region21: #{tpu_custom_call.1} parent=19 // pred_check
        %p164 = pneg %p59
      $region22: #{tpu_custom_call.1} parent=19 // pred_check_branch
        %166 = sbr.rel (%p164) target = $region24
      $region23: #{tpu_custom_call.1} parent=19 // pred_region
        %s167 = sadd.s32 %s17, %s19
        %p168 = scmp.lt.s32.totalorder %s16, 0
        %s169 = scalar_select %p168, %s16, 0
        %p170 = scmp.lt.s32.totalorder %s167, 5
        %s171 = scalar_select %p170, %s167, 5
        %s172 = smul.addr %s171, 7
        %s173 = smul.addr %s169, 42
        %s174 = sadd.s32 %s172, %s173
        %s175 = smul.addr %s174, 4
        %s176 = scalar_lea.vmem %s0, %s175
        %s177 = sadd.s32 %s17, %s19
      $region24: #{tpu_custom_call.1} parent=19 // pred_fallthru
        _
      // Predicated region
      $region25: #{tpu_custom_call.1} parent=19 // pred_check
        %p178 = pneg %p85
      $region26: #{tpu_custom_call.1} parent=19 // pred_check_branch
        %180 = sbr.rel (%p178) target = $region28
      $region27: #{tpu_custom_call.1} parent=19 // pred_region
        %p181 = scmp.lt.s32.totalorder %s19, 2
        %s182 = scalar_select %p181, %s19, 2
        %s183 = smul.addr %s182, 9
        %s184 = smul.addr %s183, 4
        %s185 = scalar_lea.vmem %s1, %s184
      $region28: #{tpu_custom_call.1} parent=19 // pred_fallthru
        _
    $region20: #{tpu_custom_call.1} parent=5 // pred_fallthru
      _
    %p186 = scmp.le.s32.totalorder 1, %s9
    %p187 = scmp.lt.s32.totalorder %s9, 13
    %p188 = pnand %p186, %p187
    %p189 = pneg %p188
    // Predicated region
    $region29: #{tpu_custom_call.1} parent=5 // pred_check
      _
    $region30: #{tpu_custom_call.1} parent=5 // pred_check_branch
      %191 = sbr.rel (%p188) target = $region32
    $region31: #{tpu_custom_call.1} parent=5 // pred_region
      %s192 = ssub.s32 %s9, 1
      %s193 = sadd.s32 %s21, %s23
      %p194 = scmp.lt.s32.totalorder %s20, 0
      %s195 = scalar_select %p194, %s20, 0
      %p196 = scmp.lt.s32.totalorder %s193, 5
      %s197 = scalar_select %p196, %s193, 5
      %s198 = smul.addr %s197, 7
      %s199 = smul.addr %s195, 42
      %s200 = sadd.s32 %s198, %s199
      %s201 = smul.addr %s200, 4
      %s202 = scalar_lea.vmem %s0, %s201
      %p203 = pneg %p65
      %p204 = pneg %p62
      %p205 = scmp.lt.s32.totalorder %s23, 2
      %s206 = scalar_select %p205, %s23, 2
      %s207 = smul.addr %s206, 9
      %s208 = smul.addr %s207, 4
      %s209 = scalar_lea.vmem %s1, %s208
      %p210 = pneg %p91
      %p211 = pneg %p88
      %p212 = pneg %p112
      %p213 = pneg %p109
      %p214 = pneg %p142
      %p215 = pneg %p139
      %s216 = smul.u32 5, %s22
      %p217 = scmp.lt.s32.totalorder %s20, 0
      %s218 = scalar_select %p217, %s20, 0
      %p219 = scmp.lt.s32.totalorder %s21, 3
      %s220 = scalar_select %p219, %s21, 3
      %p221 = scmp.lt.s32.totalorder %s216, 4
      %s222 = scalar_select %p221, %s216, 4
      %s223 = smul.addr %s220, 5
      %s224 = sadd.s32 %s222, %s223
      %s225 = smul.addr %s218, 20
      %s226 = sadd.s32 %s224, %s225
      %s227 = smul.addr %s226, 8
      %s228 = scalar_lea.vmem %s3, %s227
      %s229 = sadd.s32 %s21, %s23
      %p230 = scmp.lt.s32.totalorder %s20, 0
      %s231 = scalar_select %p230, %s20, 0
      %p232 = scmp.lt.s32.totalorder %s229, 5
      %s233 = scalar_select %p232, %s229, 5
      %s234 = smul.addr %s233, 7
      %s235 = smul.addr %s231, 42
      %s236 = sadd.s32 %s234, %s235
      %s237 = smul.addr %s236, 4
      %s238 = scalar_lea.vmem %s0, %s237
      %s239 = sadd.s32 %s21, %s23
      %p240 = scmp.lt.s32.totalorder %s23, 2
      %s241 = scalar_select %p240, %s23, 2
      %s242 = smul.addr %s241, 9
      %s243 = smul.addr %s242, 4
      %s244 = scalar_lea.vmem %s1, %s243
      %s245 = smul.u32 5, %s22
      %p246 = scmp.lt.s32.totalorder %s20, 0
      %s247 = scalar_select %p246, %s20, 0
      %p248 = scmp.lt.s32.totalorder %s21, 3
      %s249 = scalar_select %p248, %s21, 3
      %p250 = scmp.lt.s32.totalorder %s245, 4
      %s251 = scalar_select %p250, %s245, 4
      %s252 = smul.addr %s249, 5
      %s253 = sadd.s32 %s251, %s252
      %s254 = smul.addr %s247, 20
      %s255 = sadd.s32 %s253, %s254
      %s256 = smul.addr %s255, 8
      %s257 = scalar_lea.vmem %s3, %s256
      %s258 = smul.u32 5, %s22
      %v260 = vld [vmem:[%s238] sm:$0xf]
      %v261 = vld [vmem:[%s238 + $0x4] sm:$0xf]
      %v262 = vld [vmem:[%s238 + $0x8] sm:$0xf]
      %v263 = vld [vmem:[%s238 + $0xc] sm:$0xf]
      %v264 = vld [vmem:[%s238 + $0x10] sm:$0xf]
      %v265 = vld [vmem:[%s238 + $0x14] sm:$0xf]
      %v266 = vld [vmem:[%s238 + $0x18] sm:$0x3]
      %v267 = vld [vmem:[%s244] sm:$0xf]
      %s268 = scalar_lea.vmem %s244, 4
      %v269 = vld [vmem:[%s268] sm:$0xf]
      %v275 = vunpack.c.l.b16 %v260
      %v276 = vunpack.c.l.b16 %v261
      %v277 = vunpack.c.l.b16 %v262
      %v278 = vunpack.c.l.b16 %v263
      %v279 = vunpack.c.l.b16 %v264
      %v280 = vpack.c.b16 %v276, %v275
      %v281 = vpack.c.b16 %v278, %v277
      %v282 = vpack.c.b16 %v279, %v279
      %vm283 = vsmask.f32 7424
      %v285 = vshrl.u32 %v280, 16
      %v287 = vshll.u32 %v280, 16
      %v289 = vrot.slane %v287, 1
      %v290 = vor.u32 %v285, %v289
      %v292 = vshll.u32 %v281, 16
      %v294 = vrot.slane %v292, 1
      %v295 = vsel %vm283, %v290, %v294
      %v296 = vshrl.u32 %v281, 16
      %v298 = vor.u32 %v296, %v294
      %v300 = vshll.u32 %v282, 16
      %v302 = vrot.slane %v300, 1
      %v303 = vsel %vm283, %v298, %v302
      %v304 = vshrl.u32 %v282, 16
      %v306 = vor.u32 %v304, %v302
      %vm307 = vcmask 64512
      %v309 = vsel %vm307, %v295, 0
      %v312 = vsel %vm307, %v303, 0
      %v315 = vsel %vm307, %v306, 0
      %vm317 = vcmask 1043456
      %v319 = vsel %vm317, %v269, 0
      %321 = vmatprep.subr.bf16.mxu0 0
      %322 = vmatpush1.bf16.msra.mxu0 %v319
      %323 = vmatprep.subr.bf16.mxu0 0
      %324 = vmatpush1.bf16.msra.mxu0 0
      %325 = vmatprep.subr.bf16.mxu0 0
      %326 = vmatpush1.bf16.msra.mxu0 0
      %327 = vmatprep.subr.bf16.mxu0 0
      %328 = vmatpush1.bf16.msra.mxu0 0
      %329 = vmatprep.subr.bf16.mxu0 0
      %330 = vmatpush1.bf16.msra.mxu0 0
      %331 = vmatprep.subr.bf16.mxu0 0
      %332 = vmatpush1.bf16.msra.mxu0 0
      %333 = vmatprep.subr.bf16.mxu0 0
      %334 = vmatpush1.bf16.msra.mxu0 0
      %335 = vmatprep.subr.bf16.mxu0 0
      %336 = vmatpush1.bf16.msra.mxu0 0
      %337 = vmatprep.subr.bf16.mxu0 0
      %338 = vmatpush1.bf16.msra.mxu0 0
      %339 = vmatprep.subr.bf16.mxu0 0
      %340 = vmatpush1.bf16.msra.mxu0 0
      %341 = vmatprep.subr.bf16.mxu0 0
      %342 = vmatpush1.bf16.msra.mxu0 0
      %343 = vmatprep.subr.bf16.mxu0 0
      %344 = vmatpush1.bf16.msra.mxu0 0
      %345 = vmatprep.subr.bf16.mxu0 0
      %346 = vmatpush1.bf16.msra.mxu0 0
      %347 = vmatprep.subr.bf16.mxu0 0
      %348 = vmatpush1.bf16.msra.mxu0 0
      %349 = vmatprep.subr.bf16.mxu0 0
      %350 = vmatpush1.bf16.msra.mxu0 0
      %351 = vmatprep.subr.bf16.mxu0 0
      %352 = vmatpush1.bf16.msra.mxu0 0
      %353 = vmatprep.mubr.bf16.mxu0 0
      %354 = vmatmul.mubr.bf16.gmra.mrb[0].mxu0 %v309
      %v355 = vpop.f32.mrb[0].mxu0
      %v356 = vadd.f32 0.0, %v355
      %v357 = vpop.f32.mrb[0].mxu0
      %v358 = vpop.f32.mrb[0].mxu0
      %v359 = vadd.f32 0.0, %v358
      %v360 = vpop.f32.mrb[0].mxu0
      %361 = vmatprep.mubr.bf16.mxu0 0
      %362 = vmatmul.mubr.bf16.gmra.mrb[0].mxu0 %v312
      %v363 = vpop.f32.mrb[0].mxu0
      %v364 = vadd.f32 0.0, %v363
      %v365 = vpop.f32.mrb[0].mxu0
      %v366 = vpop.f32.mrb[0].mxu0
      %v367 = vadd.f32 0.0, %v366
      %v368 = vpop.f32.mrb[0].mxu0
      %369 = vmatprep.mubr.bf16.mxu0 0
      %370 = vmatmul.mubr.bf16.gmra.mrb[0].mxu0 %v315
      %v371 = vpop.f32.mrb[0].mxu0
      %v372 = vadd.f32 0.0, %v371
      %v373 = vpop.f32.mrb[0].mxu0
      %v374 = vpop.f32.mrb[0].mxu0
      %v375 = vpop.f32.mrb[0].mxu0
      %376 = vdwg.mxu0
      %v377 = vsel %vm307, %v280, 0
      %v379 = vsel %vm307, %v281, 0
      %v381 = vsel %vm307, %v282, 0
      %v384 = vsel %vm317, %v267, 0
      %386 = vmatprep.subr.bf16.mxu0 0
      %387 = vmatpush1.bf16.msra.mxu0 %v384
      %388 = vmatprep.subr.bf16.mxu0 0
      %389 = vmatpush1.bf16.msra.mxu0 0
      %390 = vmatprep.subr.bf16.mxu0 0
      %391 = vmatpush1.bf16.msra.mxu0 0
      %392 = vmatprep.subr.bf16.mxu0 0
      %393 = vmatpush1.bf16.msra.mxu0 0
      %394 = vmatprep.subr.bf16.mxu0 0
      %395 = vmatpush1.bf16.msra.mxu0 0
      %396 = vmatprep.subr.bf16.mxu0 0
      %397 = vmatpush1.bf16.msra.mxu0 0
      %398 = vmatprep.subr.bf16.mxu0 0
      %399 = vmatpush1.bf16.msra.mxu0 0
      %400 = vmatprep.subr.bf16.mxu0 0
      %401 = vmatpush1.bf16.msra.mxu0 0
      %402 = vmatprep.subr.bf16.mxu0 0
      %403 = vmatpush1.bf16.msra.mxu0 0
      %404 = vmatprep.subr.bf16.mxu0 0
      %405 = vmatpush1.bf16.msra.mxu0 0
      %406 = vmatprep.subr.bf16.mxu0 0
      %407 = vmatpush1.bf16.msra.mxu0 0
      %408 = vmatprep.subr.bf16.mxu0 0
      %409 = vmatpush1.bf16.msra.mxu0 0
      %410 = vmatprep.subr.bf16.mxu0 0
      %411 = vmatpush1.bf16.msra.mxu0 0
      %412 = vmatprep.subr.bf16.mxu0 0
      %413 = vmatpush1.bf16.msra.mxu0 0
      %414 = vmatprep.subr.bf16.mxu0 0
      %415 = vmatpush1.bf16.msra.mxu0 0
      %416 = vmatprep.subr.bf16.mxu0 0
      %417 = vmatpush1.bf16.msra.mxu0 0
      %418 = vmatprep.mubr.bf16.mxu0 0
      %419 = vmatmul.mubr.bf16.gmra.mrb[0].mxu0 %v377
      %v420 = vpop.f32.mrb[0].mxu0
      %v421 = vadd.f32 %v356, %v420
      %v422 = vpop.f32.mrb[0].mxu0
      %v423 = vpop.f32.mrb[0].mxu0
      %v424 = vadd.f32 %v359, %v423
      %v425 = vpop.f32.mrb[0].mxu0
      %426 = vmatprep.mubr.bf16.mxu0 0
      %427 = vmatmul.mubr.bf16.gmra.mrb[0].mxu0 %v379
      %v428 = vpop.f32.mrb[0].mxu0
      %v429 = vadd.f32 %v364, %v428
      %v430 = vpop.f32.mrb[0].mxu0
      %v431 = vpop.f32.mrb[0].mxu0
      %v432 = vadd.f32 %v367, %v431
      %v433 = vpop.f32.mrb[0].mxu0
      %434 = vmatprep.mubr.bf16.mxu0 0
      %435 = vmatmul.mubr.bf16.gmra.mrb[0].mxu0 %v381
      %v436 = vpop.f32.mrb[0].mxu0
      %v437 = vadd.f32 %v372, %v436
      %v438 = vpop.f32.mrb[0].mxu0
      %v439 = vpop.f32.mrb[0].mxu0
      %v440 = vpop.f32.mrb[0].mxu0
      %441 = vdwg.mxu0
      %s442 = scalar_lea.vmem %s244, 8
      %v443 = vld [vmem:[%s442] sm:$0xf]
      %vm444 = vcmask 1046528
      %v445 = vrot.slane %v280, 1
      %v446 = vrot.slane %v281, 1
      %v447 = vsel %vm444, %v445, %v446
      %v448 = vrot.slane %v282, 1
      %v449 = vsel %vm444, %v446, %v448
      %v451 = vsel %vm307, %v447, 0
      %v454 = vsel %vm307, %v449, 0
      %v457 = vsel %vm307, %v448, 0
      %v460 = vsel %vm317, %v443, 0
      %462 = vmatprep.subr.bf16.mxu0 0
      %463 = vmatpush1.bf16.msra.mxu0 %v460
      %464 = vmatprep.subr.bf16.mxu0 0
      %465 = vmatpush1.bf16.msra.mxu0 0
      %466 = vmatprep.subr.bf16.mxu0 0
      %467 = vmatpush1.bf16.msra.mxu0 0
      %468 = vmatprep.subr.bf16.mxu0 0
      %469 = vmatpush1.bf16.msra.mxu0 0
      %470 = vmatprep.subr.bf16.mxu0 0
      %471 = vmatpush1.bf16.msra.mxu0 0
      %472 = vmatprep.subr.bf16.mxu0 0
      %473 = vmatpush1.bf16.msra.mxu0 0
      %474 = vmatprep.subr.bf16.mxu0 0
      %475 = vmatpush1.bf16.msra.mxu0 0
      %476 = vmatprep.subr.bf16.mxu0 0
      %477 = vmatpush1.bf16.msra.mxu0 0
      %478 = vmatprep.subr.bf16.mxu0 0
      %479 = vmatpush1.bf16.msra.mxu0 0
      %480 = vmatprep.subr.bf16.mxu0 0
      %481 = vmatpush1.bf16.msra.mxu0 0
      %482 = vmatprep.subr.bf16.mxu0 0
      %483 = vmatpush1.bf16.msra.mxu0 0
      %484 = vmatprep.subr.bf16.mxu0 0
      %485 = vmatpush1.bf16.msra.mxu0 0
      %486 = vmatprep.subr.bf16.mxu0 0
      %487 = vmatpush1.bf16.msra.mxu0 0
      %488 = vmatprep.subr.bf16.mxu0 0
      %489 = vmatpush1.bf16.msra.mxu0 0
      %490 = vmatprep.subr.bf16.mxu0 0
      %491 = vmatpush1.bf16.msra.mxu0 0
      %492 = vmatprep.subr.bf16.mxu0 0
      %493 = vmatpush1.bf16.msra.mxu0 0
      %494 = vmatprep.mubr.bf16.mxu0 0
      %495 = vmatmul.mubr.bf16.gmra.mrb[0].mxu0 %v451
      %v496 = vpop.f32.mrb[0].mxu0
      %v497 = vadd.f32 0.0, %v496
      %v498 = vpop.f32.mrb[0].mxu0
      %v499 = vpop.f32.mrb[0].mxu0
      %v500 = vadd.f32 0.0, %v499
      %v501 = vpop.f32.mrb[0].mxu0
      %502 = vmatprep.mubr.bf16.mxu0 0
      %503 = vmatmul.mubr.bf16.gmra.mrb[0].mxu0 %v454
      %v504 = vpop.f32.mrb[0].mxu0
      %v505 = vadd.f32 0.0, %v504
      %v506 = vpop.f32.mrb[0].mxu0
      %v507 = vpop.f32.mrb[0].mxu0
      %v508 = vadd.f32 0.0, %v507
      %v509 = vpop.f32.mrb[0].mxu0
      %510 = vmatprep.mubr.bf16.mxu0 0
      %511 = vmatmul.mubr.bf16.gmra.mrb[0].mxu0 %v457
      %v512 = vpop.f32.mrb[0].mxu0
      %v513 = vadd.f32 0.0, %v512
      %v514 = vpop.f32.mrb[0].mxu0
      %v515 = vpop.f32.mrb[0].mxu0
      %v516 = vpop.f32.mrb[0].mxu0
      %517 = vdwg.mxu0
      %v518 = vadd.f32 %v421, %v497
      %v519 = vadd.f32 %v424, %v500
      %v520 = vadd.f32 %v429, %v505
      %v521 = vadd.f32 %v432, %v508
      %v522 = vadd.f32 %v437, %v513
      %s523 = scalar_lea.vmem %s244, 12
      %v524 = vld [vmem:[%s523] sm:$0xf]
      %v526 = vunpack.c.l.b16 %v265
      %v527 = vpack.c.b16 %v526, %v279
      %vm528 = vsmask.f32 4352
      %v529 = vrot.slane %v285, 3
      %v530 = vrot.slane %v287, 4
      %v531 = vor.u32 %v529, %v530
      %v532 = vrot.slane %v296, 3
      %v533 = vrot.slane %v292, 4
      %v534 = vor.u32 %v532, %v533
      %v535 = vsel %vm528, %v531, %v534
      %v537 = vshrl.u32 %v527, 16
      %v539 = vrot.slane %v537, 3
      %v540 = vshll.u32 %v527, 16
      %v542 = vrot.slane %v540, 4
      %v543 = vor.u32 %v539, %v542
      %v544 = vsel %vm528, %v534, %v543
      %v546 = vsel %vm307, %v535, 0
      %v549 = vsel %vm307, %v544, 0
      %v552 = vsel %vm307, %v543, 0
      %v555 = vsel %vm317, %v524, 0
      %557 = vmatprep.subr.bf16.mxu0 0
      %558 = vmatpush1.bf16.msra.mxu0 %v555
      %559 = vmatprep.subr.bf16.mxu0 0
      %560 = vmatpush1.bf16.msra.mxu0 0
      %561 = vmatprep.subr.bf16.mxu0 0
      %562 = vmatpush1.bf16.msra.mxu0 0
      %563 = vmatprep.subr.bf16.mxu0 0
      %564 = vmatpush1.bf16.msra.mxu0 0
      %565 = vmatprep.subr.bf16.mxu0 0
      %566 = vmatpush1.bf16.msra.mxu0 0
      %567 = vmatprep.subr.bf16.mxu0 0
      %568 = vmatpush1.bf16.msra.mxu0 0
      %569 = vmatprep.subr.bf16.mxu0 0
      %570 = vmatpush1.bf16.msra.mxu0 0
      %571 = vmatprep.subr.bf16.mxu0 0
      %572 = vmatpush1.bf16.msra.mxu0 0
      %573 = vmatprep.subr.bf16.mxu0 0
      %574 = vmatpush1.bf16.msra.mxu0 0
      %575 = vmatprep.subr.bf16.mxu0 0
      %576 = vmatpush1.bf16.msra.mxu0 0
      %577 = vmatprep.subr.bf16.mxu0 0
      %578 = vmatpush1.bf16.msra.mxu0 0
      %579 = vmatprep.subr.bf16.mxu0 0
      %580 = vmatpush1.bf16.msra.mxu0 0
      %581 = vmatprep.subr.bf16.mxu0 0
      %582 = vmatpush1.bf16.msra.mxu0 0
      %583 = vmatprep.subr.bf16.mxu0 0
      %584 = vmatpush1.bf16.msra.mxu0 0
      %585 = vmatprep.subr.bf16.mxu0 0
      %586 = vmatpush1.bf16.msra.mxu0 0
      %587 = vmatprep.subr.bf16.mxu0 0
      %588 = vmatpush1.bf16.msra.mxu0 0
      %589 = vmatprep.mubr.bf16.mxu0 0
      %590 = vmatmul.mubr.bf16.gmra.mrb[0].mxu0 %v546
      %v591 = vpop.f32.mrb[0].mxu0
      %v592 = vadd.f32 0.0, %v591
      %v593 = vpop.f32.mrb[0].mxu0
      %v594 = vpop.f32.mrb[0].mxu0
      %v595 = vadd.f32 0.0, %v594
      %v596 = vpop.f32.mrb[0].mxu0
      %597 = vmatprep.mubr.bf16.mxu0 0
      %598 = vmatmul.mubr.bf16.gmra.mrb[0].mxu0 %v549
      %v599 = vpop.f32.mrb[0].mxu0
      %v600 = vadd.f32 0.0, %v599
      %v601 = vpop.f32.mrb[0].mxu0
      %v602 = vpop.f32.mrb[0].mxu0
      %v603 = vadd.f32 0.0, %v602
      %v604 = vpop.f32.mrb[0].mxu0
      %605 = vmatprep.mubr.bf16.mxu0 0
      %606 = vmatmul.mubr.bf16.gmra.mrb[0].mxu0 %v552
      %v607 = vpop.f32.mrb[0].mxu0
      %v608 = vadd.f32 0.0, %v607
      %v609 = vpop.f32.mrb[0].mxu0
      %v610 = vpop.f32.mrb[0].mxu0
      %v611 = vpop.f32.mrb[0].mxu0
      %612 = vdwg.mxu0
      %v613 = vadd.f32 %v518, %v592
      %v614 = vadd.f32 %v519, %v595
      %v615 = vadd.f32 %v520, %v600
      %v616 = vadd.f32 %v521, %v603
      %v617 = vadd.f32 %v522, %v608
      %s618 = scalar_lea.vmem %s244, 16
      %v619 = vld [vmem:[%s618] sm:$0xf]
      %v620 = vpack.c.b16 %v277, %v276
      %v621 = vpack.c.b16 %v279, %v278
      %v622 = vpack.c.b16 %v526, %v526
      %v624 = vsel %vm307, %v620, 0
      %v627 = vsel %vm307, %v621, 0
      %v630 = vsel %vm307, %v622, 0
      %v633 = vsel %vm317, %v619, 0
      %635 = vmatprep.subr.bf16.mxu0 0
      %636 = vmatpush1.bf16.msra.mxu0 %v633
      %637 = vmatprep.subr.bf16.mxu0 0
      %638 = vmatpush1.bf16.msra.mxu0 0
      %639 = vmatprep.subr.bf16.mxu0 0
      %640 = vmatpush1.bf16.msra.mxu0 0
      %641 = vmatprep.subr.bf16.mxu0 0
      %642 = vmatpush1.bf16.msra.mxu0 0
      %643 = vmatprep.subr.bf16.mxu0 0
      %644 = vmatpush1.bf16.msra.mxu0 0
      %645 = vmatprep.subr.bf16.mxu0 0
      %646 = vmatpush1.bf16.msra.mxu0 0
      %647 = vmatprep.subr.bf16.mxu0 0
      %648 = vmatpush1.bf16.msra.mxu0 0
      %649 = vmatprep.subr.bf16.mxu0 0
      %650 = vmatpush1.bf16.msra.mxu0 0
      %651 = vmatprep.subr.bf16.mxu0 0
      %652 = vmatpush1.bf16.msra.mxu0 0
      %653 = vmatprep.subr.bf16.mxu0 0
      %654 = vmatpush1.bf16.msra.mxu0 0
      %655 = vmatprep.subr.bf16.mxu0 0
      %656 = vmatpush1.bf16.msra.mxu0 0
      %657 = vmatprep.subr.bf16.mxu0 0
      %658 = vmatpush1.bf16.msra.mxu0 0
      %659 = vmatprep.subr.bf16.mxu0 0
      %660 = vmatpush1.bf16.msra.mxu0 0
      %661 = vmatprep.subr.bf16.mxu0 0
      %662 = vmatpush1.bf16.msra.mxu0 0
      %663 = vmatprep.subr.bf16.mxu0 0
      %664 = vmatpush1.bf16.msra.mxu0 0
      %665 = vmatprep.subr.bf16.mxu0 0
      %666 = vmatpush1.bf16.msra.mxu0 0
      %667 = vmatprep.mubr.bf16.mxu0 0
      %668 = vmatmul.mubr.bf16.gmra.mrb[0].mxu0 %v624
      %v669 = vpop.f32.mrb[0].mxu0
      %v670 = vadd.f32 0.0, %v669
      %v671 = vpop.f32.mrb[0].mxu0
      %v672 = vpop.f32.mrb[0].mxu0
      %v673 = vadd.f32 0.0, %v672
      %v674 = vpop.f32.mrb[0].mxu0
      %675 = vmatprep.mubr.bf16.mxu0 0
      %676 = vmatmul.mubr.bf16.gmra.mrb[0].mxu0 %v627
      %v677 = vpop.f32.mrb[0].mxu0
      %v678 = vadd.f32 0.0, %v677
      %v679 = vpop.f32.mrb[0].mxu0
      %v680 = vpop.f32.mrb[0].mxu0
      %v681 = vadd.f32 0.0, %v680
      %v682 = vpop.f32.mrb[0].mxu0
      %683 = vmatprep.mubr.bf16.mxu0 0
      %684 = vmatmul.mubr.bf16.gmra.mrb[0].mxu0 %v630
      %v685 = vpop.f32.mrb[0].mxu0
      %v686 = vadd.f32 0.0, %v685
      %v687 = vpop.f32.mrb[0].mxu0
      %v688 = vpop.f32.mrb[0].mxu0
      %v689 = vpop.f32.mrb[0].mxu0
      %690 = vdwg.mxu0
      %v691 = vadd.f32 %v613, %v670
      %v692 = vadd.f32 %v614, %v673
      %v693 = vadd.f32 %v615, %v678
      %v694 = vadd.f32 %v616, %v681
      %v695 = vadd.f32 %v617, %v686
      %s696 = scalar_lea.vmem %s244, 20
      %v697 = vld [vmem:[%s696] sm:$0xf]
      %v698 = vshrl.u32 %v620, 16
      %v700 = vshll.u32 %v620, 16
      %v702 = vrot.slane %v700, 1
      %v703 = vor.u32 %v698, %v702
      %v704 = vshll.u32 %v621, 16
      %v706 = vrot.slane %v704, 1
      %v707 = vsel %vm283, %v703, %v706
      %v708 = vshrl.u32 %v621, 16
      %v710 = vor.u32 %v708, %v706
      %v711 = vshll.u32 %v622, 16
      %v713 = vrot.slane %v711, 1
      %v714 = vsel %vm283, %v710, %v713
      %v715 = vshrl.u32 %v622, 16
      %v717 = vor.u32 %v715, %v713
      %v719 = vsel %vm307, %v707, 0
      %v722 = vsel %vm307, %v714, 0
      %v725 = vsel %vm307, %v717, 0
      %v728 = vsel %vm317, %v697, 0
      %730 = vmatprep.subr.bf16.mxu0 0
      %731 = vmatpush1.bf16.msra.mxu0 %v728
      %732 = vmatprep.subr.bf16.mxu0 0
      %733 = vmatpush1.bf16.msra.mxu0 0
      %734 = vmatprep.subr.bf16.mxu0 0
      %735 = vmatpush1.bf16.msra.mxu0 0
      %736 = vmatprep.subr.bf16.mxu0 0
      %737 = vmatpush1.bf16.msra.mxu0 0
      %738 = vmatprep.subr.bf16.mxu0 0
      %739 = vmatpush1.bf16.msra.mxu0 0
      %740 = vmatprep.subr.bf16.mxu0 0
      %741 = vmatpush1.bf16.msra.mxu0 0
      %742 = vmatprep.subr.bf16.mxu0 0
      %743 = vmatpush1.bf16.msra.mxu0 0
      %744 = vmatprep.subr.bf16.mxu0 0
      %745 = vmatpush1.bf16.msra.mxu0 0
      %746 = vmatprep.subr.bf16.mxu0 0
      %747 = vmatpush1.bf16.msra.mxu0 0
      %748 = vmatprep.subr.bf16.mxu0 0
      %749 = vmatpush1.bf16.msra.mxu0 0
      %750 = vmatprep.subr.bf16.mxu0 0
      %751 = vmatpush1.bf16.msra.mxu0 0
      %752 = vmatprep.subr.bf16.mxu0 0
      %753 = vmatpush1.bf16.msra.mxu0 0
      %754 = vmatprep.subr.bf16.mxu0 0
      %755 = vmatpush1.bf16.msra.mxu0 0
      %756 = vmatprep.subr.bf16.mxu0 0
      %757 = vmatpush1.bf16.msra.mxu0 0
      %758 = vmatprep.subr.bf16.mxu0 0
      %759 = vmatpush1.bf16.msra.mxu0 0
      %760 = vmatprep.subr.bf16.mxu0 0
      %761 = vmatpush1.bf16.msra.mxu0 0
      %762 = vmatprep.mubr.bf16.mxu0 0
      %763 = vmatmul.mubr.bf16.gmra.mrb[0].mxu0 %v719
      %v764 = vpop.f32.mrb[0].mxu0
      %v765 = vadd.f32 0.0, %v764
      %v766 = vpop.f32.mrb[0].mxu0
      %v767 = vpop.f32.mrb[0].mxu0
      %v768 = vadd.f32 0.0, %v767
      %v769 = vpop.f32.mrb[0].mxu0
      %770 = vmatprep.mubr.bf16.mxu0 0
      %771 = vmatmul.mubr.bf16.gmra.mrb[0].mxu0 %v722
      %v772 = vpop.f32.mrb[0].mxu0
      %v773 = vadd.f32 0.0, %v772
      %v774 = vpop.f32.mrb[0].mxu0
      %v775 = vpop.f32.mrb[0].mxu0
      %v776 = vadd.f32 0.0, %v775
      %v777 = vpop.f32.mrb[0].mxu0
      %778 = vmatprep.mubr.bf16.mxu0 0
      %779 = vmatmul.mubr.bf16.gmra.mrb[0].mxu0 %v725
      %v780 = vpop.f32.mrb[0].mxu0
      %v781 = vadd.f32 0.0, %v780
      %v782 = vpop.f32.mrb[0].mxu0
      %v783 = vpop.f32.mrb[0].mxu0
      %v784 = vpop.f32.mrb[0].mxu0
      %785 = vdwg.mxu0
      %v786 = vadd.f32 %v691, %v765
      %v787 = vadd.f32 %v692, %v768
      %v788 = vadd.f32 %v693, %v773
      %v789 = vadd.f32 %v694, %v776
      %v790 = vadd.f32 %v695, %v781
      %s791 = scalar_lea.vmem %s244, 24
      %v792 = vld [vmem:[%s791] sm:$0xf]
      %v794 = vunpack.c.l.b16 %v266
      %v795 = vpack.c.b16 %v794, %v526
      %vm796 = vcmask 1044480
      %v797 = vrot.slane %v620, 3
      %v798 = vrot.slane %v621, 3
      %v799 = vsel %vm796, %v797, %v798
      %v800 = vrot.slane %v795, 3
      %v801 = vsel %vm796, %v798, %v800
      %v803 = vsel %vm307, %v799, 0
      %v806 = vsel %vm307, %v801, 0
      %v809 = vsel %vm307, %v800, 0
      %v812 = vsel %vm317, %v792, 0
      %814 = vmatprep.subr.bf16.mxu0 0
      %815 = vmatpush1.bf16.msra.mxu0 %v812
      %816 = vmatprep.subr.bf16.mxu0 0
      %817 = vmatpush1.bf16.msra.mxu0 0
      %818 = vmatprep.subr.bf16.mxu0 0
      %819 = vmatpush1.bf16.msra.mxu0 0
      %820 = vmatprep.subr.bf16.mxu0 0
      %821 = vmatpush1.bf16.msra.mxu0 0
      %822 = vmatprep.subr.bf16.mxu0 0
      %823 = vmatpush1.bf16.msra.mxu0 0
      %824 = vmatprep.subr.bf16.mxu0 0
      %825 = vmatpush1.bf16.msra.mxu0 0
      %826 = vmatprep.subr.bf16.mxu0 0
      %827 = vmatpush1.bf16.msra.mxu0 0
      %828 = vmatprep.subr.bf16.mxu0 0
      %829 = vmatpush1.bf16.msra.mxu0 0
      %830 = vmatprep.subr.bf16.mxu0 0
      %831 = vmatpush1.bf16.msra.mxu0 0
      %832 = vmatprep.subr.bf16.mxu0 0
      %833 = vmatpush1.bf16.msra.mxu0 0
      %834 = vmatprep.subr.bf16.mxu0 0
      %835 = vmatpush1.bf16.msra.mxu0 0
      %836 = vmatprep.subr.bf16.mxu0 0
      %837 = vmatpush1.bf16.msra.mxu0 0
      %838 = vmatprep.subr.bf16.mxu0 0
      %839 = vmatpush1.bf16.msra.mxu0 0
      %840 = vmatprep.subr.bf16.mxu0 0
      %841 = vmatpush1.bf16.msra.mxu0 0
      %842 = vmatprep.subr.bf16.mxu0 0
      %843 = vmatpush1.bf16.msra.mxu0 0
      %844 = vmatprep.subr.bf16.mxu0 0
      %845 = vmatpush1.bf16.msra.mxu0 0
      %846 = vmatprep.mubr.bf16.mxu0 0
      %847 = vmatmul.mubr.bf16.gmra.mrb[0].mxu0 %v803
      %v848 = vpop.f32.mrb[0].mxu0
      %v849 = vadd.f32 0.0, %v848
      %v850 = vpop.f32.mrb[0].mxu0
      %v851 = vpop.f32.mrb[0].mxu0
      %v852 = vadd.f32 0.0, %v851
      %v853 = vpop.f32.mrb[0].mxu0
      %854 = vmatprep.mubr.bf16.mxu0 0
      %855 = vmatmul.mubr.bf16.gmra.mrb[0].mxu0 %v806
      %v856 = vpop.f32.mrb[0].mxu0
      %v857 = vadd.f32 0.0, %v856
      %v858 = vpop.f32.mrb[0].mxu0
      %v859 = vpop.f32.mrb[0].mxu0
      %v860 = vadd.f32 0.0, %v859
      %v861 = vpop.f32.mrb[0].mxu0
      %862 = vmatprep.mubr.bf16.mxu0 0
      %863 = vmatmul.mubr.bf16.gmra.mrb[0].mxu0 %v809
      %v864 = vpop.f32.mrb[0].mxu0
      %v865 = vadd.f32 0.0, %v864
      %v866 = vpop.f32.mrb[0].mxu0
      %v867 = vpop.f32.mrb[0].mxu0
      %v868 = vpop.f32.mrb[0].mxu0
      %869 = vdwg.mxu0
      %v870 = vadd.f32 %v786, %v849
      %v871 = vadd.f32 %v787, %v852
      %v872 = vadd.f32 %v788, %v857
      %v873 = vadd.f32 %v789, %v860
      %v874 = vadd.f32 %v790, %v865
      %s875 = scalar_lea.vmem %s244, 28
      %v876 = vld [vmem:[%s875] sm:$0xf]
      %v877 = vrot.slane %v698, 3
      %v878 = vrot.slane %v700, 4
      %v879 = vor.u32 %v877, %v878
      %v880 = vrot.slane %v708, 3
      %v881 = vrot.slane %v704, 4
      %v882 = vor.u32 %v880, %v881
      %v883 = vsel %vm528, %v879, %v882
      %v885 = vshrl.u32 %v795, 16
      %v887 = vrot.slane %v885, 3
      %v888 = vshll.u32 %v795, 16
      %v890 = vrot.slane %v888, 4
      %v891 = vor.u32 %v887, %v890
      %v892 = vsel %vm528, %v882, %v891
      %v894 = vsel %vm307, %v883, 0
      %v897 = vsel %vm307, %v892, 0
      %v900 = vsel %vm307, %v891, 0
      %v903 = vsel %vm317, %v876, 0
      %905 = vmatprep.subr.bf16.mxu0 0
      %906 = vmatpush1.bf16.msra.mxu0 %v903
      %907 = vmatprep.subr.bf16.mxu0 0
      %908 = vmatpush1.bf16.msra.mxu0 0
      %909 = vmatprep.subr.bf16.mxu0 0
      %910 = vmatpush1.bf16.msra.mxu0 0
      %911 = vmatprep.subr.bf16.mxu0 0
      %912 = vmatpush1.bf16.msra.mxu0 0
      %913 = vmatprep.subr.bf16.mxu0 0
      %914 = vmatpush1.bf16.msra.mxu0 0
      %915 = vmatprep.subr.bf16.mxu0 0
      %916 = vmatpush1.bf16.msra.mxu0 0
      %917 = vmatprep.subr.bf16.mxu0 0
      %918 = vmatpush1.bf16.msra.mxu0 0
      %919 = vmatprep.subr.bf16.mxu0 0
      %920 = vmatpush1.bf16.msra.mxu0 0
      %921 = vmatprep.subr.bf16.mxu0 0
      %922 = vmatpush1.bf16.msra.mxu0 0
      %923 = vmatprep.subr.bf16.mxu0 0
      %924 = vmatpush1.bf16.msra.mxu0 0
      %925 = vmatprep.subr.bf16.mxu0 0
      %926 = vmatpush1.bf16.msra.mxu0 0
      %927 = vmatprep.subr.bf16.mxu0 0
      %928 = vmatpush1.bf16.msra.mxu0 0
      %929 = vmatprep.subr.bf16.mxu0 0
      %930 = vmatpush1.bf16.msra.mxu0 0
      %931 = vmatprep.subr.bf16.mxu0 0
      %932 = vmatpush1.bf16.msra.mxu0 0
      %933 = vmatprep.subr.bf16.mxu0 0
      %934 = vmatpush1.bf16.msra.mxu0 0
      %935 = vmatprep.subr.bf16.mxu0 0
      %936 = vmatpush1.bf16.msra.mxu0 0
      %937 = vmatprep.mubr.bf16.mxu0 0
      %938 = vmatmul.mubr.bf16.gmra.mrb[0].mxu0 %v894
      %v939 = vpop.f32.mrb[0].mxu0
      %v940 = vadd.f32 0.0, %v939
      %v941 = vpop.f32.mrb[0].mxu0
      %v942 = vpop.f32.mrb[0].mxu0
      %v943 = vadd.f32 0.0, %v942
      %v944 = vpop.f32.mrb[0].mxu0
      %945 = vmatprep.mubr.bf16.mxu0 0
      %946 = vmatmul.mubr.bf16.gmra.mrb[0].mxu0 %v897
      %v947 = vpop.f32.mrb[0].mxu0
      %v948 = vadd.f32 0.0, %v947
      %v949 = vpop.f32.mrb[0].mxu0
      %v950 = vpop.f32.mrb[0].mxu0
      %v951 = vadd.f32 0.0, %v950
      %v952 = vpop.f32.mrb[0].mxu0
      %953 = vmatprep.mubr.bf16.mxu0 0
      %954 = vmatmul.mubr.bf16.gmra.mrb[0].mxu0 %v900
      %v955 = vpop.f32.mrb[0].mxu0
      %v956 = vadd.f32 0.0, %v955
      %v957 = vpop.f32.mrb[0].mxu0
      %v958 = vpop.f32.mrb[0].mxu0
      %v959 = vpop.f32.mrb[0].mxu0
      %960 = vdwg.mxu0
      %v961 = vadd.f32 %v870, %v940
      %v962 = vadd.f32 %v871, %v943
      %v963 = vadd.f32 %v872, %v948
      %v964 = vadd.f32 %v873, %v951
      %v965 = vadd.f32 %v874, %v956
      %s966 = scalar_lea.vmem %s244, 32
      %v967 = vld [vmem:[%s966] sm:$0xf]
      %v968 = vpack.c.b16 %v794, %v794
      %v969 = vsel %vm307, %v527, 0
      %v972 = vsel %vm307, %v968, 0
      %v975 = vsel %vm317, %v967, 0
      %977 = vmatprep.subr.bf16.mxu0 0
      %978 = vmatpush1.bf16.msra.mxu0 %v975
      %979 = vmatprep.subr.bf16.mxu0 0
      %980 = vmatpush1.bf16.msra.mxu0 0
      %981 = vmatprep.subr.bf16.mxu0 0
      %982 = vmatpush1.bf16.msra.mxu0 0
      %983 = vmatprep.subr.bf16.mxu0 0
      %984 = vmatpush1.bf16.msra.mxu0 0
      %985 = vmatprep.subr.bf16.mxu0 0
      %986 = vmatpush1.bf16.msra.mxu0 0
      %987 = vmatprep.subr.bf16.mxu0 0
      %988 = vmatpush1.bf16.msra.mxu0 0
      %989 = vmatprep.subr.bf16.mxu0 0
      %990 = vmatpush1.bf16.msra.mxu0 0
      %991 = vmatprep.subr.bf16.mxu0 0
      %992 = vmatpush1.bf16.msra.mxu0 0
      %993 = vmatprep.subr.bf16.mxu0 0
      %994 = vmatpush1.bf16.msra.mxu0 0
      %995 = vmatprep.subr.bf16.mxu0 0
      %996 = vmatpush1.bf16.msra.mxu0 0
      %997 = vmatprep.subr.bf16.mxu0 0
      %998 = vmatpush1.bf16.msra.mxu0 0
      %999 = vmatprep.subr.bf16.mxu0 0
      %1000 = vmatpush1.bf16.msra.mxu0 0
      %1001 = vmatprep.subr.bf16.mxu0 0
      %1002 = vmatpush1.bf16.msra.mxu0 0
      %1003 = vmatprep.subr.bf16.mxu0 0
      %1004 = vmatpush1.bf16.msra.mxu0 0
      %1005 = vmatprep.subr.bf16.mxu0 0
      %1006 = vmatpush1.bf16.msra.mxu0 0
      %1007 = vmatprep.subr.bf16.mxu0 0
      %1008 = vmatpush1.bf16.msra.mxu0 0
      %1009 = vmatprep.mubr.bf16.mxu0 0
      %1010 = vmatmul.mubr.bf16.gmra.mrb[0].mxu0 %v379
      %v1011 = vpop.f32.mrb[0].mxu0
      %v1012 = vadd.f32 0.0, %v1011
      %v1013 = vpop.f32.mrb[0].mxu0
      %v1014 = vpop.f32.mrb[0].mxu0
      %v1015 = vadd.f32 0.0, %v1014
      %v1016 = vpop.f32.mrb[0].mxu0
      %1017 = vmatprep.mubr.bf16.mxu0 0
      %1018 = vmatmul.mubr.bf16.gmra.mrb[0].mxu0 %v969
      %v1019 = vpop.f32.mrb[0].mxu0
      %v1020 = vadd.f32 0.0, %v1019
      %v1021 = vpop.f32.mrb[0].mxu0
      %v1022 = vpop.f32.mrb[0].mxu0
      %v1023 = vadd.f32 0.0, %v1022
      %v1024 = vpop.f32.mrb[0].mxu0
      %1025 = vmatprep.mubr.bf16.mxu0 0
      %1026 = vmatmul.mubr.bf16.gmra.mrb[0].mxu0 %v972
      %v1027 = vpop.f32.mrb[0].mxu0
      %v1028 = vadd.f32 0.0, %v1027
      %v1029 = vpop.f32.mrb[0].mxu0
      %v1030 = vpop.f32.mrb[0].mxu0
      %v1031 = vpop.f32.mrb[0].mxu0
      %1032 = vdwg.mxu0
      %v1033 = vadd.f32 %v961, %v1012
      %v1034 = vadd.f32 %v962, %v1015
      %v1035 = vadd.f32 %v963, %v1020
      %v1036 = vadd.f32 %v964, %v1023
      %v1037 = vadd.f32 %v965, %v1028
      %p1038 = scmp.eq.s32.totalorder %s23, 0
      // Predicated region
      $region33: #{tpu_custom_call.1} parent=31 // pred_check
        %p1039 = pneg %p1038
      $region34: #{tpu_custom_call.1} parent=31 // pred_check_branch
        %1041 = sbr.rel (%p1039) target = $region36
      $region35: #{tpu_custom_call.1} parent=31 // pred_region
        %v1042 = vld [vmem:[%s2] sm:$0x1]
        %v1044 = vlaneseq
        %v1045 = vshrl.u32 %v1044, 7
        %v1046 = vsub.s32 0, %v1045
        %v1047 = vrot.slane %v1042, %v1046
        %vm1049 = vcmask 130048
        %1050 = vst.msk [vmem:[%s257] sm:$0xff] %vm1049, %v1047
        %1051 = vst.msk [vmem:[%s257 + $0x8] sm:$0xff] %vm1049, %v1047
        %1052 = vst.msk [vmem:[%s257 + $0x10] sm:$0xff] %vm1049, %v1047
        %1053 = vst.msk [vmem:[%s257 + $0x18] sm:$0xff] %vm1049, %v1047
        %vm1054 = vcmask 124928
        %1055 = vst.msk [vmem:[%s257 + $0x20] sm:$0x7] %vm1054, %v1047
      $region36: #{tpu_custom_call.1} parent=31 // pred_fallthru
        _
      %v1056 = vld [vmem:[%s257] sm:$0xff]
      %v1057 = vld [vmem:[%s257 + $0x8] sm:$0xff]
      %v1058 = vld [vmem:[%s257 + $0x10] sm:$0xff]
      %v1059 = vld [vmem:[%s257 + $0x18] sm:$0xff]
      %v1060 = vld [vmem:[%s257 + $0x20] sm:$0x7]
      %v1061 = vadd.f32 %v1056, %v1033
      %v1062 = vadd.f32 %v1057, %v1034
      %v1063 = vadd.f32 %v1058, %v1035
      %v1064 = vadd.f32 %v1059, %v1036
      %v1065 = vadd.f32 %v1060, %v1037
      %vm1066 = vcmask 130048
      %1067 = vst.msk [vmem:[%s257] sm:$0xff] %vm1066, %v1061
      %1068 = vst.msk [vmem:[%s257 + $0x8] sm:$0xff] %vm1066, %v1062
      %1069 = vst.msk [vmem:[%s257 + $0x10] sm:$0xff] %vm1066, %v1063
      %1070 = vst.msk [vmem:[%s257 + $0x18] sm:$0xff] %vm1066, %v1064
      %vm1071 = vcmask 124928
      %1072 = vst.msk [vmem:[%s257 + $0x20] sm:$0x7] %vm1071, %v1065
      %s1073 = smul.u32 5, %s22
      %p1074 = scmp.lt.s32.totalorder %s20, 0
      %s1075 = scalar_select %p1074, %s20, 0
      %p1076 = scmp.lt.s32.totalorder %s21, 3
      %s1077 = scalar_select %p1076, %s21, 3
      %p1078 = scmp.lt.s32.totalorder %s1073, 4
      %s1079 = scalar_select %p1078, %s1073, 4
      %s1080 = smul.addr %s1077, 5
      %s1081 = sadd.s32 %s1079, %s1080
      %s1082 = smul.addr %s1075, 20
      %s1083 = sadd.s32 %s1081, %s1082
      %s1084 = smul.addr %s1083, 8
      %s1085 = scalar_lea.vmem %s3, %s1084
      // Predicated region
      $region37: #{tpu_custom_call.1} parent=31 // pred_check
        %p1086 = pneg %p139
      $region38: #{tpu_custom_call.1} parent=31 // pred_check_branch
        %1088 = sbr.rel (%p1086) target = $region40
      $region39: #{tpu_custom_call.1} parent=31 // pred_region
        %s1089 = smul.u32 5, %s22
      $region40: #{tpu_custom_call.1} parent=31 // pred_fallthru
        _
    $region32: #{tpu_custom_call.1} parent=5 // pred_fallthru
      _
    %p1090 = scmp.le.s32.totalorder 2, %s9
    // Predicated region
    $region41: #{tpu_custom_call.1} parent=5 // pred_check
      %p1091 = pneg %p1090
    $region42: #{tpu_custom_call.1} parent=5 // pred_check_branch
      %1093 = sbr.rel (%p1091) target = $region44
    $region43: #{tpu_custom_call.1} parent=5 // pred_region
      %s1094 = ssub.s32 %s9, 2
      // Predicated region
      $region45: #{tpu_custom_call.1} parent=43 // pred_check
        %p1095 = pneg %p145
      $region46: #{tpu_custom_call.1} parent=43 // pred_check_branch
        %1097 = sbr.rel (%p1095) target = $region48
      $region47: #{tpu_custom_call.1} parent=43 // pred_region
        %s1098 = smul.u32 5, %s26
        %p1099 = scmp.lt.s32.totalorder %s24, 0
        %s1100 = scalar_select %p1099, %s24, 0
        %p1101 = scmp.lt.s32.totalorder %s25, 3
        %s1102 = scalar_select %p1101, %s25, 3
        %p1103 = scmp.lt.s32.totalorder %s1098, 4
        %s1104 = scalar_select %p1103, %s1098, 4
        %s1105 = smul.addr %s1102, 5
        %s1106 = sadd.s32 %s1104, %s1105
        %s1107 = smul.addr %s1100, 20
        %s1108 = sadd.s32 %s1106, %s1107
        %s1109 = smul.addr %s1108, 8
        %s1110 = scalar_lea.vmem %s3, %s1109
      $region48: #{tpu_custom_call.1} parent=43 // pred_fallthru
        _
    $region44: #{tpu_custom_call.1} parent=5 // pred_fallthru
      _
  $region6: #{tpu_custom_call.1} parent=0 // loop_footer
    %s13 = sadd.s32 1, %s9
  $region7: #{tpu_custom_call.1} parent=0 // loop_footer_branch
    %8 = sbr.rel target = $region3
  $region8: #{tpu_custom_call.1} parent=0 // loop_exit
    _

</llo_original>
